<compile_context>
chip_gen: v7x
topology: tpu7x:2x2x1
jax: 0.10.0
libtpu: 0.0.40
codegen_flags: <defaults>
</compile_context>

<pallas_src>
import math

import jax
import jax.numpy as jnp
from jax.experimental import pallas as pl
from jax.experimental.pallas import tpu as pltpu


# --------------------------------------------------------------------------- #
# Pallas backward kernel:  dL/dx = (-coeff) * dL/dy                            #
# --------------------------------------------------------------------------- #

_TARGET_LANES = 1024       # wide lane dim -> unmasked wide vector stores
_TARGET_BLOCK_ROWS = 512   # 512 x 1024 x 4B = 2 MiB per f32 buffer


def _round_up(x: int, m: int) -> int:
    return ((x + m - 1) // m) * m


def _plan_tiles(n_elems: int):
    """Pick a lane-dense, (8,128)-aligned tiling for a flat array."""
    lanes = _TARGET_LANES if n_elems >= 8 * _TARGET_LANES else 128
    rows = _round_up(max(1, (n_elems + lanes - 1) // lanes), 8)
    num_blocks = max(1, (rows + _TARGET_BLOCK_ROWS - 1) // _TARGET_BLOCK_ROWS)
    block_rows = _round_up((rows + num_blocks - 1) // num_blocks, 8)
    rows_padded = block_rows * num_blocks
    return lanes, block_rows, rows_padded


def _grad_reverse_kernel(neg_coeff_ref, g_ref, o_ref):
    # neg_coeff is pre-negated f32, scalar-prefetched into SMEM once before the
    # grid runs.  Multiply in f32; cast only on the store (keeps low-precision
    # gradients un-quantized by the coefficient).
    o_ref[...] = (g_ref[...].astype(jnp.float32) * neg_coeff_ref[0]).astype(o_ref.dtype)


def _run_grad_reverse(coeff, g):
    """Tiled Pallas elementwise:  out = -coeff * g  (same shape/dtype as g)."""
    orig_shape, orig_dtype = g.shape, g.dtype
    flat = jnp.reshape(g, (-1,))
    n = flat.shape[0]

    lanes, block_rows, rows_padded = _plan_tiles(n)
    padded = rows_padded * lanes
    if padded != n:                       # wrapper-side padding for odd sizes
        flat = jnp.pad(flat, (0, padded - n))
    g2d = jnp.reshape(flat, (rows_padded, lanes))

    neg_coeff = jnp.reshape(jnp.asarray(-coeff, dtype=jnp.float32), (1,))
    grid = (rows_padded // block_rows,)

    out2d = pl.pallas_call(
        _grad_reverse_kernel,
        out_shape=jax.ShapeDtypeStruct((rows_padded, lanes), orig_dtype),
        grid_spec=pltpu.PrefetchScalarGridSpec(
            num_scalar_prefetch=1,        # neg_coeff lands in SMEM once
            grid=grid,
            in_specs=[pl.BlockSpec((block_rows, lanes), lambda i, nc: (i, 0))],
            out_specs=pl.BlockSpec((block_rows, lanes), lambda i, nc: (i, 0)),
        ),
        compiler_params=pltpu.CompilerParams(
            dimension_semantics=("parallel",)),   # independent tiles; 2-TC split on v7x
    )(neg_coeff, g2d)

    return jnp.reshape(jnp.reshape(out2d, (-1,))[:n], orig_shape)


# --------------------------------------------------------------------------- #
# Differentiable gradient-reversal op                                          #
# --------------------------------------------------------------------------- #

@jax.custom_vjp
def gradient_reverse(x, coeff):
    # PyTorch forward is `input.view_as(input)`: a pure view.  True no-op here
    # (no Pallas copy, zero HBM traffic).
    del coeff
    return x


def _grl_fwd(x, coeff):
    return x, coeff


def _grl_bwd(coeff, g):
    # Cotangent for coeff is an explicit zero of matching shape/dtype (avoids
    # pytree-structure issues from returning None).
    return _run_grad_reverse(coeff, g), jnp.zeros_like(coeff)


gradient_reverse.defvjp(_grl_fwd, _grl_bwd)


class WarmStartGradientReverseLayer:
    """Forward identity; backward multiplies the gradient by -coeff, where
    coeff follows the warm-start schedule of the PyTorch module."""

    def __init__(self, alpha=1.0, lo=0.0, hi=1.0, max_iters=1000.0,
                 auto_step=False):
        self.alpha = alpha
        self.lo = lo
        self.hi = hi
        self.iter_num = 0
        self.max_iters = max_iters
        self.auto_step = auto_step

    def coeff_value(self) -> float:
        return float(
            2.0 * (self.hi - self.lo)
            / (1.0 + math.exp(-self.alpha * self.iter_num / self.max_iters))
            - (self.hi - self.lo) + self.lo)

    def __call__(self, x):
        coeff = jnp.asarray(self.coeff_value(), dtype=jnp.float32)
        if self.auto_step:
            self.step()
        return gradient_reverse(x, coeff)

    def step(self):
        self.iter_num += 1


# --------------------------------------------------------------------------- #
# DomainAdversarialLoss (discriminator / BCE / accuracy in plain JAX)          #
# --------------------------------------------------------------------------- #

def make_domain_discriminator(key, in_dim, hidden_dim):
    """Small deterministic MLP (Linear->ReLU->Linear->sigmoid); stand-in for
    the externally injected PyTorch `domain_discriminator` module."""
    k1, k2 = jax.random.split(key)
    w1 = jax.random.normal(k1, (in_dim, hidden_dim), jnp.float32) / math.sqrt(in_dim)
    b1 = jnp.zeros((hidden_dim,), jnp.float32)
    w2 = jax.random.normal(k2, (hidden_dim, 1), jnp.float32) / math.sqrt(hidden_dim)
    b2 = jnp.zeros((1,), jnp.float32)

    def apply(f):
        h = jax.nn.relu(jnp.dot(f, w1) + b1)
        return jax.nn.sigmoid(jnp.dot(h, w2) + b2)

    return apply


def binary_accuracy(output, target):
    """Accuracy (in %) for binary classification (mirrors the PyTorch helper)."""
    batch_size = target.shape[0]
    pred = jnp.reshape(jnp.transpose(output >= 0.5).astype(jnp.float32), (-1,))
    correct = jnp.sum((pred == jnp.reshape(target, (-1,))).astype(jnp.float32))
    return correct * (100.0 / batch_size)


def _bce_mean(p, y):
    p = jnp.clip(p, 1e-7, 1.0 - 1e-7)
    return -jnp.mean(y * jnp.log(p) + (1.0 - y) * jnp.log(1.0 - p))


class DomainAdversarialLoss:
    # TODO(synk): only reduction='mean' (the spec's default) is implemented.
    def __init__(self, domain_discriminator, reduction="mean"):
        assert reduction == "mean"
        self.grl = WarmStartGradientReverseLayer(alpha=1.0, lo=0.0, hi=1.0,
                                                 max_iters=1000, auto_step=True)
        self.domain_discriminator = domain_discriminator
        self.domain_discriminator_accuracy = None

    def __call__(self, f_s, f_t, w_s, w_t):
        f = self.grl(jnp.concatenate((f_s, f_t), axis=0))
        d = self.domain_discriminator(f)
        d_s, d_t = jnp.split(d, 2, axis=0)
        d_label_s = jnp.ones((f_s.shape[0], 1), dtype=d_s.dtype)
        d_label_t = jnp.zeros((f_t.shape[0], 1), dtype=d_t.dtype)
        self.domain_discriminator_accuracy = 0.5 * (
            binary_accuracy(jax.lax.stop_gradient(d_s), d_label_s)
            + binary_accuracy(jax.lax.stop_gradient(d_t), d_label_t))
        source_loss = jnp.mean(w_s * jnp.reshape(_bce_mean(d_s, d_label_s), (-1,)))
        target_loss = jnp.mean(w_t * jnp.reshape(_bce_mean(d_t, d_label_t), (-1,)))
        return 0.5 * (source_loss + target_loss)


# ---------------------------------- main ----------------------------------- #

if __name__ == "__main__":
    key = jax.random.PRNGKey(0)
    kx, kodd, ks, kt, kdisc = jax.random.split(key, 5)

    # ---- 1) GRL: forward identity, Pallas backward == -coeff ---------------
    x = jax.random.normal(kx, (2, 4, 16, 16), dtype=jnp.float32)   # NCHW
    grl = WarmStartGradientReverseLayer(alpha=1.0, lo=0.0, hi=1.0,
                                        max_iters=1000.0, auto_step=False)
    grl.iter_num = 500                      # warm-started coefficient
    coeff_val = grl.coeff_value()

    y = jax.block_until_ready(grl(x))
    assert y.shape == x.shape and y.dtype == x.dtype
    assert bool(jnp.array_equal(y, x)), "forward must be identity"

    g = jax.block_until_ready(jax.grad(lambda t: jnp.sum(grl(t)))(x))
    assert bool(jnp.allclose(g, -coeff_val * jnp.ones_like(x), atol=1e-6)), \
        "backward must be -coeff * grad_output"

    # Unaligned total size (3*5*7 = 105) exercises wrapper-side padding.
    x_odd = jax.random.normal(kodd, (3, 5, 7), dtype=jnp.float32)
    g_odd = jax.block_until_ready(jax.grad(lambda t: jnp.sum(grl(t)))(x_odd))
    assert bool(jnp.allclose(g_odd, -coeff_val * jnp.ones_like(x_odd), atol=1e-6))

    # ---- 2) Full DomainAdversarialLoss forward + grad ----------------------
    batch, feat_dim, hidden = 2, 32, 64
    f_s = jax.random.normal(ks, (batch, feat_dim), dtype=jnp.float32)
    f_t = jax.random.normal(kt, (batch, feat_dim), dtype=jnp.float32)
    w_s = jnp.ones((batch,), dtype=jnp.float32)
    w_t = jnp.ones((batch,), dtype=jnp.float32)

    disc = make_domain_discriminator(kdisc, feat_dim, hidden)
    dal = DomainAdversarialLoss(disc)

    loss = jax.block_until_ready(dal(f_s, f_t, w_s, w_t))
    assert loss.shape == () and bool(jnp.isfinite(loss))
    assert bool(jnp.isfinite(dal.domain_discriminator_accuracy))

    # Gradient w.r.t. the source features flows through the Pallas GRL backward.
    dfs = jax.block_until_ready(jax.grad(lambda a: dal(a, f_t, w_s, w_t))(f_s))
    assert dfs.shape == f_s.shape and bool(jnp.all(jnp.isfinite(dfs)))

    print("KERNEL_OK")
</pallas_src>

<mosaic_0001>
module attributes {stable_mosaic.version = 11 : i64} {
  func.func @_grad_reverse_kernel(%arg0: i32, %arg1: memref<1xf32, #tpu.memory_space<smem>>, %arg2: memref<16x128xf32, #tpu.memory_space<vmem>>, %arg3: memref<16x128xf32, #tpu.memory_space<vmem>>) attributes {dimension_semantics = [#tpu.dimension_semantics<parallel>], iteration_bounds = array<i64: 1>, scalar_prefetch = 1 : i64, scratch_operands = 0 : i64, tpu.core_type = #tpu.core_type<tc>, window_params = [{transform_indices = @transform_0, window_bounds = array<i64: 16, 128>}, {transform_indices = @transform_1, window_bounds = array<i64: 16, 128>}]} {
    %c0 = arith.constant 0 : index
    %c0_0 = arith.constant 0 : index
    %0 = vector.load %arg2[%c0, %c0_0] : memref<16x128xf32, #tpu.memory_space<vmem>>, vector<16x128xf32>
    %c0_1 = arith.constant 0 : index
    %1 = memref.load %arg1[%c0_1] : memref<1xf32, #tpu.memory_space<smem>>
    %2 = vector.broadcast %1 : f32 to vector<16x128xf32>
    %3 = arith.mulf %0, %2 : vector<16x128xf32>
    %c0_2 = arith.constant 0 : index
    %c0_3 = arith.constant 0 : index
    %4 = vector.load %arg3[%c0_2, %c0_3] : memref<16x128xf32, #tpu.memory_space<vmem>>, vector<16x128xf32>
    tpu.vector_store %arg3[%c0_2, %c0_3], %3 {strides = array<i32>} : memref<16x128xf32, #tpu.memory_space<vmem>>, vector<16x128xf32>,
    return
  }
  func.func @transform_0(%arg0: i32, %arg1: memref<1xf32, #tpu.memory_space<smem>>) -> (i32, i32) {
    %c0_i32 = arith.constant 0 : i32
    %c0_i32_0 = arith.constant 0 : i32
    return %arg0, %c0_i32 : i32, i32
  }
  func.func @transform_1(%arg0: i32, %arg1: memref<1xf32, #tpu.memory_space<smem>>) -> (i32, i32) {
    %c0_i32 = arith.constant 0 : i32
    %c0_i32_0 = arith.constant 0 : i32
    return %arg0, %c0_i32 : i32, i32
  }
}

</mosaic_0001>

<llo_original>
// kernel: tpu_custom_call.1
$region0: #{tpu_custom_call.1}
  #allocation0 [shape = 'u32[]', space=smem, size = 0x4, offset = 0x4, fixed_abs, tag = 'smem constant byte address 0x4 - core index']
  #allocation1 [shape = 'u32[144,128]{1,0:T(1,128)}', space=vmem, size = 0x12000, scoped, tag = 'internal scratch']
  #allocation2 [shape = 's32[1]{0}', space=sflag, size = 0x4, scoped, tag = 'scoped memory for tpu_custom_call.1']
  #allocation3 [shape = 'f32[1]{0:T(128)S(6)}', space=smem, size = 0x200, scoped, tag = 'prefetched SMEM operand 0']
  %s0 = inlined_call_operand.<no memory space> [shape: f32[1], index: 0, kind: input, shape index: {}]
  %s1 = inlined_call_operand.hbm [shape: f32[16,128], index: 1, kind: input, shape index: {}]
  %s2 = inlined_call_operand.hbm [shape: f32[16,128], index: 2, kind: output, shape index: {}]
  %s3 = sld [smem:[#allocation0]]
  $region18: #{tpu_custom_call.1} parent=0
    _
  %s5 = ssub.s32 1, %s3
  %s6 = scalar_select 0, %s5, %s3
  %7 = sst [smem:[#allocation3]] %s0
  $region1: #{tpu_custom_call.1} parent=0
    #allocation4 [shape = 'u8[8192]{0}', space=vmem, size = 0x2000, scoped, tag = 'input window, operand 1, single buffered']
    #allocation5 [shape = 's32[1]{0}', space=sflag, size = 0x4, scoped, tag = 'scoped memory for tpu_custom_call.1']
    #allocation6 [shape = 's32[1]{0}', space=sflag, size = 0x4, scoped, tag = 'scoped memory for tpu_custom_call.1']
    #allocation7 [shape = 'u8[8192]{0}', space=vmem, size = 0x2000, scoped, tag = 'output window, operand 0, single buffered']
    %8 = vsyncpa [#allocation5], 0
    %9 = vsyncpa [#allocation6], 0
    // Predicated region
    $region2: #{tpu_custom_call.1} parent=1 // pred_check
      _
    $region3: #{tpu_custom_call.1} parent=1 // pred_check_branch
      %11 = sbr.rel (0) target = $region5
    $region4: #{tpu_custom_call.1} parent=1 // pred_region
      %s13 = ssub.s32 256, 256
      %14 = vsyncadd [#allocation5], %s13
      %s15 = sshll.u32 [#allocation4], 4
      %s16 = int_to_ptr.vmem [resolvable:$true] %s15
      %21 = dma.hbm_to_vmem [thread:$0]  %s1, 256, %s16, [#allocation5], 128, 128, 8
    $region5: #{tpu_custom_call.1} parent=1 // pred_fallthru
      _
    // Predicated region
    $region6: #{tpu_custom_call.1} parent=1 // pred_check
      _
    $region7: #{tpu_custom_call.1} parent=1 // pred_check_branch
      %23 = sbr.rel (0) target = $region9
    $region8: #{tpu_custom_call.1} parent=1 // pred_region
      %24 = dma.done [#allocation5], 256
    $region9: #{tpu_custom_call.1} parent=1 // pred_fallthru
      _
    %v25 = vld [vmem:[#allocation4] sm:$0xff]
    %v26 = vld [vmem:[#allocation4 + $0x8] sm:$0xff]
    %s27 = sld [smem:[#allocation3]]
    %v28 = vstv %s27
    %v29 = vmul.f32 %v25, %v28
    %v30 = vmul.f32 %v26, %v28
    %31 = vst [vmem:[#allocation7] sm:$0xff] %v29
    %32 = vst [vmem:[#allocation7 + $0x8] sm:$0xff] %v30
    // Predicated region
    $region10: #{tpu_custom_call.1} parent=1 // pred_check
      _
    $region11: #{tpu_custom_call.1} parent=1 // pred_check_branch
      %34 = sbr.rel (0) target = $region13
    $region12: #{tpu_custom_call.1} parent=1 // pred_region
      %s36 = ssub.s32 256, 256
      %37 = vsyncadd [#allocation6], %s36
      %s38 = sshll.u32 [#allocation7], 4
      %s39 = int_to_ptr.vmem [resolvable:$true] %s38
      %44 = dma.vmem_to_hbm [thread:$0]  %s39, 256, %s2, [#allocation6], 128, 128, 8
    $region13: #{tpu_custom_call.1} parent=1 // pred_fallthru
      _
    // Predicated region
    $region14: #{tpu_custom_call.1} parent=1 // pred_check
      _
    $region15: #{tpu_custom_call.1} parent=1 // pred_check_branch
      %46 = sbr.rel (0) target = $region17
    $region16: #{tpu_custom_call.1} parent=1 // pred_region
      %47 = dma.done [#allocation6], 256
    $region17: #{tpu_custom_call.1} parent=1 // pred_fallthru
      _
    %48 = vsyncpa [#allocation5], 1
    %49 = vsyncpa [#allocation6], 1

</llo_original>
